<compile_context>
chip_gen: v5e
topology: v5e:2x2
jax: 0.10.0
libtpu: 0.0.40
codegen_flags: <defaults>
</compile_context>

<pallas_src>
import jax
import jax.numpy as jnp
from jax.experimental import pallas as pl
from jax.experimental.pallas import tpu as pltpu

ACTION_DIM = 32
VALUE_DIM = 32
IN_DIM = ACTION_DIM + VALUE_DIM      # 64  (feature width)
HIDDEN_DIM = 64                      # net_arch[0]
OUT_DIM = 32                         # net_arch[1] (== latent_dim_pi == latent_dim_vf)
FUSED_HIDDEN = 2 * HIDDEN_DIM        # 128 (policy|value hidden, fused)
FUSED_OUT = 2 * OUT_DIM              # 64  (pi|vf output, fused)

# Lane-packed (2 batch rows per 128-lane vector) shapes.
PACKED_IN = 2 * IN_DIM               # 128
PACKED_HIDDEN = 2 * FUSED_HIDDEN     # 256
PACKED_OUT = 2 * FUSED_OUT           # 128

DEFAULT_TILE_B = 8192                # batch rows per grid step (packed tile 4096x128)


def _round_up(x, m):
    return ((x + m - 1) // m) * m


def _fused_packed_kernel(x_ref, w1_ref, b1_ref, w2_ref, b2_ref, y_ref):
    # Layer 1: [tp, 128] @ [128, 256] -> [tp, 256]; each packed row carries two
    # batch rows, the block-diagonal weight keeps them independent.
    h = jnp.tanh(
        jnp.dot(x_ref[...], w1_ref[...], preferred_element_type=jnp.float32)
        + b1_ref[...])
    # Layer 2: [tp, 256] @ [256, 128] -> [tp, 128]; lanes 0:32 / 32:64 are
    # pi/vf of batch row 2r, lanes 64:96 / 96:128 are pi/vf of row 2r+1.
    y_ref[...] = jnp.tanh(
        jnp.dot(h, w2_ref[...], preferred_element_type=jnp.float32)
        + b2_ref[...])


def _blockdiag2(w):
    k, n = w.shape
    wp = jnp.zeros((2 * k, 2 * n), jnp.float32)
    wp = wp.at[:k, :n].set(w)
    wp = wp.at[k:, n:].set(w)
    return wp


def _fuse_params(params):
    """Block-diagonal branch fusion + lane-packing duplication of the weights."""
    # Branch fusion: W1 = blockdiag(pw1, vw1) (64,128); W2 = blockdiag(pw2, vw2) (128,64).
    w1 = jnp.zeros((IN_DIM, FUSED_HIDDEN), jnp.float32)
    w1 = w1.at[:ACTION_DIM, :HIDDEN_DIM].set(params["pw1"])
    w1 = w1.at[ACTION_DIM:, HIDDEN_DIM:].set(params["vw1"])
    b1 = jnp.concatenate([params["pb1"], params["vb1"]], axis=1)   # (1, 128)

    w2 = jnp.zeros((FUSED_HIDDEN, FUSED_OUT), jnp.float32)
    w2 = w2.at[:HIDDEN_DIM, :OUT_DIM].set(params["pw2"])
    w2 = w2.at[HIDDEN_DIM:, OUT_DIM:].set(params["vw2"])
    b2 = jnp.concatenate([params["pb2"], params["vb2"]], axis=1)   # (1, 64)

    # Lane packing: two batch rows per 128-lane vector -> duplicate blockdiag.
    w1p = _blockdiag2(w1)            # (128, 256)
    b1p = jnp.tile(b1, (1, 2))       # (1, 256)
    w2p = _blockdiag2(w2)            # (256, 128)
    b2p = jnp.tile(b2, (1, 2))       # (1, 128)
    return w1p, b1p, w2p, b2p


def _choose_tile_rows(b_even, desired_tb):
    """Batch rows per grid step.  Packed tile = tb//2 must be a multiple of 8
    sublanes => tb multiple of 16.  Keep >= ~4 grid steps for large batches so
    v7x's two TensorCores both get work; tiny batches collapse to one block."""
    tb = _round_up(max(desired_tb, 16), 16)
    quarter = max(_round_up(pl.cdiv(b_even, 4), 16), 16)
    return min(tb, quarter)


def custom_split_forward(features, params, tile_b=DEFAULT_TILE_B):
    """features: [B, 64] float32. Returns (latent_pi, latent_vf), each [B, 32]."""
    B = features.shape[0]
    w1p, b1p, w2p, b2p = _fuse_params(params)

    # Lane-pack two batch rows per 128-lane vector.  Only an odd B needs a
    # 1-row pad; the ragged last grid block is handled by Pallas boundary
    # masking (garbage rows are row-independent and never written back).
    b_even = B + (B & 1)
    x = features
    if b_even != B:
        x = jnp.pad(x, ((0, 1), (0, 0)))
    rows = b_even // 2
    x_packed = x.reshape(rows, PACKED_IN)           # free row-major reshape

    tb = _choose_tile_rows(b_even, tile_b)
    tp = tb // 2                                    # packed rows per block (mult of 8)
    grid = (pl.cdiv(rows, tp),)

    cost = pl.CostEstimate(
        flops=2 * b_even * (IN_DIM * FUSED_HIDDEN + FUSED_HIDDEN * FUSED_OUT),
        transcendentals=b_even * (FUSED_HIDDEN + FUSED_OUT),
        bytes_accessed=b_even * (IN_DIM + FUSED_OUT) * 4
        + (w1p.size + b1p.size + w2p.size + b2p.size) * 4,
    )

    y_packed = pl.pallas_call(
        _fused_packed_kernel,
        out_shape=jax.ShapeDtypeStruct((rows, PACKED_OUT), jnp.float32),
        grid_spec=pltpu.PrefetchScalarGridSpec(
            num_scalar_prefetch=0,
            grid=grid,
            in_specs=[
                pl.BlockSpec((tp, PACKED_IN), lambda i: (i, 0)),             # streamed
                pl.BlockSpec((PACKED_IN, PACKED_HIDDEN), lambda i: (0, 0)),  # resident
                pl.BlockSpec((1, PACKED_HIDDEN), lambda i: (0, 0)),          # resident
                pl.BlockSpec((PACKED_HIDDEN, PACKED_OUT), lambda i: (0, 0)),
                pl.BlockSpec((1, PACKED_OUT), lambda i: (0, 0)),
            ],
            out_specs=pl.BlockSpec((tp, PACKED_OUT), lambda i: (i, 0)),
        ),
        compiler_params=pltpu.CompilerParams(
            dimension_semantics=("parallel",),       # lets v7x split batch over 2 TCs
            vmem_limit_bytes=32 * 1024 * 1024),      # safe on v5e/v6e/v7x
        cost_estimate=cost,
    )(x_packed, w1p, b1p, w2p, b2p)

    # Unpack lanes back to [B, 64] (free reshape), then split pi/vf per the
    # module contract.  TODO(synk): downstream consumers could take the fused
    # [B, 64] buffer directly to avoid materializing the two slices.
    y = y_packed.reshape(b_even, FUSED_OUT)[:B]
    return y[:, :OUT_DIM], y[:, OUT_DIM:]


def _init_linear(key, in_dim, out_dim):
    # Deterministic PyTorch-style init: U(-1/sqrt(fan_in), 1/sqrt(fan_in)).
    kw, kb = jax.random.split(key)
    bound = 1.0 / jnp.sqrt(jnp.float32(in_dim))
    # Stored as (in_dim, out_dim): equivalent to PyTorch weight.T
    w = jax.random.uniform(kw, (in_dim, out_dim), jnp.float32, -bound, bound)
    b = jax.random.uniform(kb, (1, out_dim), jnp.float32, -bound, bound)
    return w, b


def make_params(key):
    k1, k2, k3, k4 = jax.random.split(key, 4)
    pw1, pb1 = _init_linear(k1, ACTION_DIM, HIDDEN_DIM)
    pw2, pb2 = _init_linear(k2, HIDDEN_DIM, OUT_DIM)
    vw1, vb1 = _init_linear(k3, VALUE_DIM, HIDDEN_DIM)
    vw2, vb2 = _init_linear(k4, HIDDEN_DIM, OUT_DIM)
    return dict(pw1=pw1, pb1=pb1, pw2=pw2, pb2=pb2,
                vw1=vw1, vb1=vb1, vw2=vw2, vb2=vb2)


def reference_forward(features, p):
    a = features[:, :ACTION_DIM]
    v = features[:, ACTION_DIM:ACTION_DIM + VALUE_DIM]
    h_pi = jnp.tanh(a @ p["pw1"] + p["pb1"])
    pi = jnp.tanh(h_pi @ p["pw2"] + p["pb2"])
    h_vf = jnp.tanh(v @ p["vw1"] + p["vb1"])
    vf = jnp.tanh(h_vf @ p["vw2"] + p["vb2"])
    return pi, vf


if __name__ == "__main__":
    key = jax.random.PRNGKey(0)
    k1, k2, k3, k_param = jax.random.split(key, 4)
    params = make_params(k_param)

    # Case 1: small even batch, single (ragged) grid step, default tile.
    B1 = 8
    feats1 = jax.random.normal(k1, (B1, IN_DIM), jnp.float32)
    pi1, vf1 = custom_split_forward(feats1, params)
    jax.block_until_ready((pi1, vf1))
    ref_pi1, ref_vf1 = reference_forward(feats1, params)
    assert pi1.shape == (B1, OUT_DIM) and vf1.shape == (B1, OUT_DIM)
    assert jnp.allclose(pi1, ref_pi1, atol=1e-5, rtol=1e-5)
    assert jnp.allclose(vf1, ref_vf1, atol=1e-5, rtol=1e-5)

    # Case 2: non-multiple batch with a small tile -> multi-step grid with a
    # ragged last block (exercises Pallas boundary masking, no explicit pad).
    B2 = 20
    feats2 = jax.random.normal(k2, (B2, IN_DIM), jnp.float32)
    pi2, vf2 = custom_split_forward(feats2, params, tile_b=16)
    jax.block_until_ready((pi2, vf2))
    ref_pi2, ref_vf2 = reference_forward(feats2, params)
    assert pi2.shape == (B2, OUT_DIM) and vf2.shape == (B2, OUT_DIM)
    assert jnp.allclose(pi2, ref_pi2, atol=1e-5, rtol=1e-5)
    assert jnp.allclose(vf2, ref_vf2, atol=1e-5, rtol=1e-5)

    # Case 3: odd batch -> exercises the 1-row even-pad path for lane packing.
    B3 = 13
    feats3 = jax.random.normal(k3, (B3, IN_DIM), jnp.float32)
    pi3, vf3 = custom_split_forward(feats3, params)
    jax.block_until_ready((pi3, vf3))
    ref_pi3, ref_vf3 = reference_forward(feats3, params)
    assert pi3.shape == (B3, OUT_DIM) and vf3.shape == (B3, OUT_DIM)
    assert jnp.allclose(pi3, ref_pi3, atol=1e-5, rtol=1e-5)
    assert jnp.allclose(vf3, ref_vf3, atol=1e-5, rtol=1e-5)

    print("KERNEL_OK")
</pallas_src>

<mosaic_0001>
module attributes {stable_mosaic.version = 11 : i64} {
  func.func @_fused_packed_kernel(%arg0: i32, %arg1: memref<8x128xf32, #tpu.memory_space<vmem>>, %arg2: memref<128x256xf32, #tpu.memory_space<vmem>>, %arg3: memref<1x256xf32, #tpu.memory_space<vmem>>, %arg4: memref<256x128xf32, #tpu.memory_space<vmem>>, %arg5: memref<1x128xf32, #tpu.memory_space<vmem>>, %arg6: memref<8x128xf32, #tpu.memory_space<vmem>>) attributes {dimension_semantics = [#tpu.dimension_semantics<parallel>], iteration_bounds = array<i64: 1>, scalar_prefetch = 0 : i64, scratch_operands = 0 : i64, tpu.core_type = #tpu.core_type<tc>, window_params = [{transform_indices = @transform_0, window_bounds = array<i64: 8, 128>}, {pipeline_mode = #tpu.pipeline_mode<synchronous>, transform_indices = @transform_1, window_bounds = array<i64: 128, 256>}, {pipeline_mode = #tpu.pipeline_mode<synchronous>, transform_indices = @transform_2, window_bounds = array<i64: 1, 256>}, {pipeline_mode = #tpu.pipeline_mode<synchronous>, transform_indices = @transform_3, window_bounds = array<i64: 256, 128>}, {pipeline_mode = #tpu.pipeline_mode<synchronous>, transform_indices = @transform_4, window_bounds = array<i64: 1, 128>}, {transform_indices = @transform_5, window_bounds = array<i64: 8, 128>}]} {
    %c0 = arith.constant 0 : index
    %c0_0 = arith.constant 0 : index
    %0 = vector.load %arg1[%c0, %c0_0] : memref<8x128xf32, #tpu.memory_space<vmem>>, vector<8x128xf32>
    %c0_1 = arith.constant 0 : index
    %c0_2 = arith.constant 0 : index
    %1 = vector.load %arg2[%c0_1, %c0_2] : memref<128x256xf32, #tpu.memory_space<vmem>>, vector<128x256xf32>
    %cst = arith.constant dense<0.000000e+00> : vector<8x256xf32>
    %2 = tpu.matmul %0, %1, %cst {dimension_numbers = #tpu.dot_dimension_numbers<[1], [0], [0], [1], [0, 0, 1, 1], [], []>} : vector<8x128xf32>, vector<128x256xf32>, vector<8x256xf32> -> vector<8x256xf32>
    %c0_3 = arith.constant 0 : index
    %c0_4 = arith.constant 0 : index
    %3 = vector.load %arg3[%c0_3, %c0_4] : memref<1x256xf32, #tpu.memory_space<vmem>>, vector<1x256xf32>
    %4 = vector.broadcast %3 : vector<1x256xf32> to vector<8x256xf32>
    %5 = arith.addf %2, %4 : vector<8x256xf32>
    %6 = math.tanh %5 : vector<8x256xf32>
    %c0_5 = arith.constant 0 : index
    %c0_6 = arith.constant 0 : index
    %7 = vector.load %arg4[%c0_5, %c0_6] : memref<256x128xf32, #tpu.memory_space<vmem>>, vector<256x128xf32>
    %cst_7 = arith.constant dense<0.000000e+00> : vector<8x128xf32>
    %8 = tpu.matmul %6, %7, %cst_7 {dimension_numbers = #tpu.dot_dimension_numbers<[1], [0], [0], [1], [0, 0, 1, 1], [], []>} : vector<8x256xf32>, vector<256x128xf32>, vector<8x128xf32> -> vector<8x128xf32>
    %c0_8 = arith.constant 0 : index
    %c0_9 = arith.constant 0 : index
    %9 = vector.load %arg5[%c0_8, %c0_9] : memref<1x128xf32, #tpu.memory_space<vmem>>, vector<1x128xf32>
    %10 = vector.broadcast %9 : vector<1x128xf32> to vector<8x128xf32>
    %11 = arith.addf %8, %10 : vector<8x128xf32>
    %12 = math.tanh %11 : vector<8x128xf32>
    %c0_10 = arith.constant 0 : index
    %c0_11 = arith.constant 0 : index
    %13 = vector.load %arg6[%c0_10, %c0_11] : memref<8x128xf32, #tpu.memory_space<vmem>>, vector<8x128xf32>
    tpu.vector_store %arg6[%c0_10, %c0_11], %12 {strides = array<i32>} : memref<8x128xf32, #tpu.memory_space<vmem>>, vector<8x128xf32>,
    return
  }
  func.func @transform_0(%arg0: i32) -> (i32, i32) {
    %c0_i32 = arith.constant 0 : i32
    %c0_i32_0 = arith.constant 0 : i32
    return %arg0, %c0_i32 : i32, i32
  }
  func.func @transform_1(%arg0: i32) -> (i32, i32) {
    %c0_i32 = arith.constant 0 : i32
    %c0_i32_0 = arith.constant 0 : i32
    %c0_i32_1 = arith.constant 0 : i32
    return %c0_i32, %c0_i32_0 : i32, i32
  }
  func.func @transform_2(%arg0: i32) -> (i32, i32) {
    %c0_i32 = arith.constant 0 : i32
    %c0_i32_0 = arith.constant 0 : i32
    %c0_i32_1 = arith.constant 0 : i32
    return %c0_i32, %c0_i32_0 : i32, i32
  }
  func.func @transform_3(%arg0: i32) -> (i32, i32) {
    %c0_i32 = arith.constant 0 : i32
    %c0_i32_0 = arith.constant 0 : i32
    %c0_i32_1 = arith.constant 0 : i32
    return %c0_i32, %c0_i32_0 : i32, i32
  }
  func.func @transform_4(%arg0: i32) -> (i32, i32) {
    %c0_i32 = arith.constant 0 : i32
    %c0_i32_0 = arith.constant 0 : i32
    %c0_i32_1 = arith.constant 0 : i32
    return %c0_i32, %c0_i32_0 : i32, i32
  }
  func.func @transform_5(%arg0: i32) -> (i32, i32) {
    %c0_i32 = arith.constant 0 : i32
    %c0_i32_0 = arith.constant 0 : i32
    return %arg0, %c0_i32 : i32, i32
  }
}

</mosaic_0001>

<llo_original>
// kernel: tpu_custom_call.1
$region0: #{tpu_custom_call.1}
  #allocation0 [shape = 'u32[]', space=smem, size = 0x4, offset = 0x4, fixed_abs, tag = 'smem constant byte address 0x4 - core index']
  #allocation1 [shape = 'u32[72,128]{1,0:T(1,128)}', space=vmem, size = 0x9000, scoped, tag = 'internal scratch']
  %s0 = inlined_call_operand.hbm [shape: f32[4,128], index: 0, kind: input, shape index: {}]
  %s1 = inlined_call_operand.hbm [shape: f32[128,256], index: 1, kind: input, shape index: {}]
  %s2 = inlined_call_operand.hbm [shape: f32[1,256], index: 2, kind: input, shape index: {}]
  %s3 = inlined_call_operand.hbm [shape: f32[256,128], index: 3, kind: input, shape index: {}]
  %s4 = inlined_call_operand.vmem [shape: f32[1,128], index: 4, kind: input, shape index: {}]
  %s5 = inlined_call_operand.hbm [shape: f32[4,128], index: 5, kind: output, shape index: {}]
  %s6 = sld [smem:[#allocation0]]
  $region46: #{tpu_custom_call.1} parent=0
    _
  %s8 = ssub.s32 1, %s6
  %s9 = scalar_select 0, %s8, %s6
  $region1: #{tpu_custom_call.1} parent=0
    #allocation2 [shape = 'u8[4096]{0}', space=vmem, size = 0x1000, scoped, tag = 'input window, operand 0, single buffered']
    #allocation3 [shape = 's32[1]{0}', space=sflag, size = 0x4, scoped, tag = 'scoped memory for tpu_custom_call.1']
    #allocation4 [shape = 's32[1]{0}', space=sflag, size = 0x4, scoped, tag = 'scoped memory for tpu_custom_call.1']
    #allocation5 [shape = 'u8[131072]{0}', space=vmem, size = 0x20000, scoped, tag = 'input window, operand 1, single buffered']
    #allocation6 [shape = 's32[1]{0}', space=sflag, size = 0x4, scoped, tag = 'scoped memory for tpu_custom_call.1']
    #allocation7 [shape = 'u8[1024]{0}', space=vmem, size = 0x400, scoped, tag = 'input window, operand 2, single buffered']
    #allocation8 [shape = 'u8[131072]{0}', space=vmem, size = 0x20000, scoped, tag = 'input window, operand 3, single buffered']
    #allocation9 [shape = 's32[1]{0}', space=sflag, size = 0x4, scoped, tag = 'scoped memory for tpu_custom_call.1']
    #allocation10 [shape = 'u8[4096]{0}', space=vmem, size = 0x1000, scoped, tag = 'output window, operand 0, single buffered']
    %10 = vsyncpa [#allocation3], 0
    %11 = vsyncpa [#allocation6], 0
    %12 = vsyncpa [#allocation9], 0
    %13 = vsyncpa [#allocation4], 0
    // Predicated region
    $region2: #{tpu_custom_call.1} parent=1 // pred_check
      _
    $region3: #{tpu_custom_call.1} parent=1 // pred_check_branch
      %15 = sbr.rel (0) target = $region5
    $region4: #{tpu_custom_call.1} parent=1 // pred_region
      %17 = vsyncadd [#allocation3], 64
      %s18 = sshll.u32 %s0, 4
      %s19 = int_to_ptr.hbm [resolvable:$true] %s18
      %s20 = sshll.u32 [#allocation2], 4
      %s21 = int_to_ptr.vmem [resolvable:$true] %s20
      %26 = dma.hbm_to_vmem [thread:$0]  %s19, 64, %s21, [#allocation3], 64, 64, 4
    $region5: #{tpu_custom_call.1} parent=1 // pred_fallthru
      _
    // Predicated region
    $region6: #{tpu_custom_call.1} parent=1 // pred_check
      _
    $region7: #{tpu_custom_call.1} parent=1 // pred_check_branch
      %28 = sbr.rel (0) target = $region9
    $region8: #{tpu_custom_call.1} parent=1 // pred_region
      %30 = vsyncadd [#allocation6], 0
      %s31 = sshll.u32 %s1, 4
      %s32 = int_to_ptr.hbm [resolvable:$true] %s31
      %s33 = sshll.u32 [#allocation5], 4
      %s34 = int_to_ptr.vmem [resolvable:$true] %s33
      %39 = dma.hbm_to_vmem [thread:$0]  %s32, 4096, %s34, [#allocation6], 256, 256, 16
    $region9: #{tpu_custom_call.1} parent=1 // pred_fallthru
      _
    // Predicated region
    $region10: #{tpu_custom_call.1} parent=1 // pred_check
      _
    $region11: #{tpu_custom_call.1} parent=1 // pred_check_branch
      %41 = sbr.rel (0) target = $region13
    $region12: #{tpu_custom_call.1} parent=1 // pred_region
      %43 = vsyncadd [#allocation6], 0
      %s45 = sshll.u32 %s2, 4
      %s46 = int_to_ptr.hbm [resolvable:$true] %s45
      %s47 = sshll.u32 [#allocation7], 4
      %s48 = int_to_ptr.vmem [resolvable:$true] %s47
      %50 = dma.hbm_to_vmem [thread:$0]  %s46, 32, %s48, [#allocation6]
    $region13: #{tpu_custom_call.1} parent=1 // pred_fallthru
      _
    // Predicated region
    $region14: #{tpu_custom_call.1} parent=1 // pred_check
      _
    $region15: #{tpu_custom_call.1} parent=1 // pred_check_branch
      %52 = sbr.rel (0) target = $region17
    $region16: #{tpu_custom_call.1} parent=1 // pred_region
      %54 = vsyncadd [#allocation9], 0
      %s55 = sshll.u32 %s3, 4
      %s56 = int_to_ptr.hbm [resolvable:$true] %s55
      %s57 = sshll.u32 [#allocation8], 4
      %s58 = int_to_ptr.vmem [resolvable:$true] %s57
      %63 = dma.hbm_to_vmem [thread:$0]  %s56, 4096, %s58, [#allocation9], 128, 128, 8
    $region17: #{tpu_custom_call.1} parent=1 // pred_fallthru
      _
    // Predicated region
    $region18: #{tpu_custom_call.1} parent=1 // pred_check
      _
    $region19: #{tpu_custom_call.1} parent=1 // pred_check_branch
      %65 = sbr.rel (0) target = $region21
    $region20: #{tpu_custom_call.1} parent=1 // pred_region
      _
    $region21: #{tpu_custom_call.1} parent=1 // pred_fallthru
      _
    // Predicated region
    $region22: #{tpu_custom_call.1} parent=1 // pred_check
      _
    $region23: #{tpu_custom_call.1} parent=1 // pred_check_branch
      %67 = sbr.rel (0) target = $region25
    $region24: #{tpu_custom_call.1} parent=1 // pred_region
      %69 = dma.done [#allocation3], 128
    $region25: #{tpu_custom_call.1} parent=1 // pred_fallthru
      _
    // Predicated region
    $region26: #{tpu_custom_call.1} parent=1 // pred_check
      _
    $region27: #{tpu_custom_call.1} parent=1 // pred_check_branch
      %71 = sbr.rel (0) target = $region29
    $region28: #{tpu_custom_call.1} parent=1 // pred_region
      %73 = dma.done [#allocation6], 4096
    $region29: #{tpu_custom_call.1} parent=1 // pred_fallthru
      _
    // Predicated region
    $region30: #{tpu_custom_call.1} parent=1 // pred_check
      _
    $region31: #{tpu_custom_call.1} parent=1 // pred_check_branch
      %75 = sbr.rel (0) target = $region33
    $region32: #{tpu_custom_call.1} parent=1 // pred_region
      %77 = dma.done [#allocation6], 32
    $region33: #{tpu_custom_call.1} parent=1 // pred_fallthru
      _
    // Predicated region
    $region34: #{tpu_custom_call.1} parent=1 // pred_check
      _
    $region35: #{tpu_custom_call.1} parent=1 // pred_check_branch
      %79 = sbr.rel (0) target = $region37
    $region36: #{tpu_custom_call.1} parent=1 // pred_region
      %81 = dma.done [#allocation9], 4096
    $region37: #{tpu_custom_call.1} parent=1 // pred_fallthru
      _
    %v82 = vld [vmem:[#allocation2] sm:$0xff]
    %v83 = vld [vmem:[#allocation5] sm:$0xff]
    %v84 = vld [vmem:[#allocation5 + $0x8] sm:$0xff]
    %v85 = vld [vmem:[#allocation5 + $0x10] sm:$0xff]
    %v86 = vld [vmem:[#allocation5 + $0x18] sm:$0xff]
    %v87 = vld [vmem:[#allocation5 + $0x20] sm:$0xff]
    %v88 = vld [vmem:[#allocation5 + $0x28] sm:$0xff]
    %v89 = vld [vmem:[#allocation5 + $0x30] sm:$0xff]
    %v90 = vld [vmem:[#allocation5 + $0x38] sm:$0xff]
    %v91 = vld [vmem:[#allocation5 + $0x40] sm:$0xff]
    %v92 = vld [vmem:[#allocation5 + $0x48] sm:$0xff]
    %v93 = vld [vmem:[#allocation5 + $0x50] sm:$0xff]
    %v94 = vld [vmem:[#allocation5 + $0x58] sm:$0xff]
    %v95 = vld [vmem:[#allocation5 + $0x60] sm:$0xff]
    %v96 = vld [vmem:[#allocation5 + $0x68] sm:$0xff]
    %v97 = vld [vmem:[#allocation5 + $0x70] sm:$0xff]
    %v98 = vld [vmem:[#allocation5 + $0x78] sm:$0xff]
    %v99 = vld [vmem:[#allocation5 + $0x80] sm:$0xff]
    %v100 = vld [vmem:[#allocation5 + $0x88] sm:$0xff]
    %v101 = vld [vmem:[#allocation5 + $0x90] sm:$0xff]
    %v102 = vld [vmem:[#allocation5 + $0x98] sm:$0xff]
    %v103 = vld [vmem:[#allocation5 + $0xa0] sm:$0xff]
    %v104 = vld [vmem:[#allocation5 + $0xa8] sm:$0xff]
    %v105 = vld [vmem:[#allocation5 + $0xb0] sm:$0xff]
    %v106 = vld [vmem:[#allocation5 + $0xb8] sm:$0xff]
    %v107 = vld [vmem:[#allocation5 + $0xc0] sm:$0xff]
    %v108 = vld [vmem:[#allocation5 + $0xc8] sm:$0xff]
    %v109 = vld [vmem:[#allocation5 + $0xd0] sm:$0xff]
    %v110 = vld [vmem:[#allocation5 + $0xd8] sm:$0xff]
    %v111 = vld [vmem:[#allocation5 + $0xe0] sm:$0xff]
    %v112 = vld [vmem:[#allocation5 + $0xe8] sm:$0xff]
    %v113 = vld [vmem:[#allocation5 + $0xf0] sm:$0xff]
    %v114 = vld [vmem:[#allocation5 + $0xf8] sm:$0xff]
    %v115 = vld [vmem:[#allocation7] sm:$0x3]
    %v117 = vperm.slane %v115, 0
    %v118 = vperm.slane %v115, 1
    %121 = vmatpush.msra.mxu0 %v113
    %122 = vmatpush.msra.mxu0 %v111
    %123 = vmatpush.msra.mxu0 %v109
    %124 = vmatpush.msra.mxu0 %v107
    %125 = vmatpush.msra.mxu0 %v105
    %126 = vmatpush.msra.mxu0 %v103
    %127 = vmatpush.msra.mxu0 %v101
    %128 = vmatpush.msra.mxu0 %v99
    %129 = vmatpush.msra.mxu0 %v97
    %130 = vmatpush.msra.mxu0 %v95
    %131 = vmatpush.msra.mxu0 %v93
    %132 = vmatpush.msra.mxu0 %v91
    %133 = vmatpush.msra.mxu0 %v89
    %134 = vmatpush.msra.mxu0 %v87
    %135 = vmatpush.msra.mxu0 %v85
    %136 = vmatpush.msra.mxu0 %v83
    %137 = vmatmul.f32.gmra.mxu0 %v82
    %v138 = vpop.f32.mrf.mxu0
    %v139 = vadd.f32 %v117, %v138
    %140 = vdwg.mxu0
    %141 = vmatpush.msra.mxu0 %v114
    %142 = vmatpush.msra.mxu0 %v112
    %143 = vmatpush.msra.mxu0 %v110
    %144 = vmatpush.msra.mxu0 %v108
    %145 = vmatpush.msra.mxu0 %v106
    %146 = vmatpush.msra.mxu0 %v104
    %147 = vmatpush.msra.mxu0 %v102
    %148 = vmatpush.msra.mxu0 %v100
    %149 = vmatpush.msra.mxu0 %v98
    %150 = vmatpush.msra.mxu0 %v96
    %151 = vmatpush.msra.mxu0 %v94
    %152 = vmatpush.msra.mxu0 %v92
    %153 = vmatpush.msra.mxu0 %v90
    %154 = vmatpush.msra.mxu0 %v88
    %155 = vmatpush.msra.mxu0 %v86
    %156 = vmatpush.msra.mxu0 %v84
    %157 = vmatmul.f32.gmra.mxu0 %v82
    %v158 = vpop.f32.mrf.mxu0
    %v159 = vadd.f32 %v118, %v158
    %160 = vdwg.mxu0
    %v161 = vtanh.pop %v139
    %v162 = vtanh.pop %v159
    %v163 = vld [vmem:[#allocation8] sm:$0xff]
    %v164 = vld [vmem:[#allocation8 + $0x8] sm:$0xff]
    %v165 = vld [vmem:[#allocation8 + $0x10] sm:$0xff]
    %v166 = vld [vmem:[#allocation8 + $0x18] sm:$0xff]
    %v167 = vld [vmem:[#allocation8 + $0x20] sm:$0xff]
    %v168 = vld [vmem:[#allocation8 + $0x28] sm:$0xff]
    %v169 = vld [vmem:[#allocation8 + $0x30] sm:$0xff]
    %v170 = vld [vmem:[#allocation8 + $0x38] sm:$0xff]
    %v171 = vld [vmem:[#allocation8 + $0x40] sm:$0xff]
    %v172 = vld [vmem:[#allocation8 + $0x48] sm:$0xff]
    %v173 = vld [vmem:[#allocation8 + $0x50] sm:$0xff]
    %v174 = vld [vmem:[#allocation8 + $0x58] sm:$0xff]
    %v175 = vld [vmem:[#allocation8 + $0x60] sm:$0xff]
    %v176 = vld [vmem:[#allocation8 + $0x68] sm:$0xff]
    %v177 = vld [vmem:[#allocation8 + $0x70] sm:$0xff]
    %v178 = vld [vmem:[#allocation8 + $0x78] sm:$0xff]
    %v179 = vld [vmem:[#allocation8 + $0x80] sm:$0xff]
    %v180 = vld [vmem:[#allocation8 + $0x88] sm:$0xff]
    %v181 = vld [vmem:[#allocation8 + $0x90] sm:$0xff]
    %v182 = vld [vmem:[#allocation8 + $0x98] sm:$0xff]
    %v183 = vld [vmem:[#allocation8 + $0xa0] sm:$0xff]
    %v184 = vld [vmem:[#allocation8 + $0xa8] sm:$0xff]
    %v185 = vld [vmem:[#allocation8 + $0xb0] sm:$0xff]
    %v186 = vld [vmem:[#allocation8 + $0xb8] sm:$0xff]
    %v187 = vld [vmem:[#allocation8 + $0xc0] sm:$0xff]
    %v188 = vld [vmem:[#allocation8 + $0xc8] sm:$0xff]
    %v189 = vld [vmem:[#allocation8 + $0xd0] sm:$0xff]
    %v190 = vld [vmem:[#allocation8 + $0xd8] sm:$0xff]
    %v191 = vld [vmem:[#allocation8 + $0xe0] sm:$0xff]
    %v192 = vld [vmem:[#allocation8 + $0xe8] sm:$0xff]
    %v193 = vld [vmem:[#allocation8 + $0xf0] sm:$0xff]
    %v194 = vld [vmem:[#allocation8 + $0xf8] sm:$0xff]
    %v195 = vld [vmem:[%s4] sm:$0x1]
    %v197 = vperm.slane %v195, 0
    %199 = vmatpush.msra.mxu0 %v178
    %200 = vmatpush.msra.mxu0 %v177
    %201 = vmatpush.msra.mxu0 %v176
    %202 = vmatpush.msra.mxu0 %v175
    %203 = vmatpush.msra.mxu0 %v174
    %204 = vmatpush.msra.mxu0 %v173
    %205 = vmatpush.msra.mxu0 %v172
    %206 = vmatpush.msra.mxu0 %v171
    %207 = vmatpush.msra.mxu0 %v170
    %208 = vmatpush.msra.mxu0 %v169
    %209 = vmatpush.msra.mxu0 %v168
    %210 = vmatpush.msra.mxu0 %v167
    %211 = vmatpush.msra.mxu0 %v166
    %212 = vmatpush.msra.mxu0 %v165
    %213 = vmatpush.msra.mxu0 %v164
    %214 = vmatpush.msra.mxu0 %v163
    %215 = vmatmul.f32.gmra.mxu0 %v161
    %v216 = vpop.f32.mrf.mxu0
    %v217 = vadd.f32 %v197, %v216
    %218 = vdwg.mxu0
    %219 = vmatpush.msra.mxu0 %v194
    %220 = vmatpush.msra.mxu0 %v193
    %221 = vmatpush.msra.mxu0 %v192
    %222 = vmatpush.msra.mxu0 %v191
    %223 = vmatpush.msra.mxu0 %v190
    %224 = vmatpush.msra.mxu0 %v189
    %225 = vmatpush.msra.mxu0 %v188
    %226 = vmatpush.msra.mxu0 %v187
    %227 = vmatpush.msra.mxu0 %v186
    %228 = vmatpush.msra.mxu0 %v185
    %229 = vmatpush.msra.mxu0 %v184
    %230 = vmatpush.msra.mxu0 %v183
    %231 = vmatpush.msra.mxu0 %v182
    %232 = vmatpush.msra.mxu0 %v181
    %233 = vmatpush.msra.mxu0 %v180
    %234 = vmatpush.msra.mxu0 %v179
    %235 = vmatmul.f32.gmra.mxu0 %v162
    %v236 = vpop.f32.mrf.mxu0
    %v237 = vadd.f32 %v217, %v236
    %238 = vdwg.mxu0
    %v239 = vtanh.pop %v237
    %240 = vst [vmem:[#allocation10] sm:$0xff] %v239
    // Predicated region
    $region38: #{tpu_custom_call.1} parent=1 // pred_check
      _
    $region39: #{tpu_custom_call.1} parent=1 // pred_check_branch
      %242 = sbr.rel (0) target = $region41
    $region40: #{tpu_custom_call.1} parent=1 // pred_region
      %244 = vsyncadd [#allocation4], 64
      %s245 = sshll.u32 [#allocation10], 4
      %s246 = int_to_ptr.vmem [resolvable:$true] %s245
      %s247 = sshll.u32 %s5, 4
      %s248 = int_to_ptr.hbm [resolvable:$true] %s247
      %253 = dma.vmem_to_hbm [thread:$0]  %s246, 64, %s248, [#allocation4], 64, 64, 4
    $region41: #{tpu_custom_call.1} parent=1 // pred_fallthru
      _
    // Predicated region
    $region42: #{tpu_custom_call.1} parent=1 // pred_check
      _
    $region43: #{tpu_custom_call.1} parent=1 // pred_check_branch
      %255 = sbr.rel (0) target = $region45
    $region44: #{tpu_custom_call.1} parent=1 // pred_region
      %257 = dma.done [#allocation4], 128
    $region45: #{tpu_custom_call.1} parent=1 // pred_fallthru
      _
    %258 = vsyncpa [#allocation3], 1
    %259 = vsyncpa [#allocation6], 1
    %260 = vsyncpa [#allocation9], 1
    %261 = vsyncpa [#allocation4], 1

</llo_original>
